<compile_context>
chip_gen: v7x
topology: tpu7x:2x2x1
jax: 0.10.0
libtpu: 0.0.40
codegen_flags: <defaults>
</compile_context>

<pallas_src>
import jax
import jax.numpy as jnp
from jax.experimental import pallas as pl
from jax.experimental.pallas import tpu as pltpu


def _round_up(n, m):
    return ((n + m - 1) // m) * m


def mlp_kernel(x_ref, w1_ref, b1_ref, w2_ref, b2_ref, out_ref):
    # x_ref: (TB, D) f32   w1_ref: (D, H) bf16   b1_ref: (1, H) f32
    # w2_ref: (1, H) f32   b2_ref: (1,) f32 in SMEM   out_ref: (TB, 1) f32
    x = x_ref[...].astype(jnp.bfloat16)  # bf16 MXU operands, f32 accumulate
    h = jnp.dot(x, w1_ref[...], preferred_element_type=jnp.float32)  # (TB, H)
    h = jnp.maximum(h + b1_ref[...], 0.0)          # bias + ReLU (f32, VPU)

    # Linear 2 (output width 1): VPU multiply + cross-lane (XLU) reduce beats
    # a (TB, H) x (H, 1) MXU matmul that would use a single output column.
    o = jnp.sum(h * w2_ref[...], axis=-1, keepdims=True)   # (TB, 1)
    out_ref[...] = (o + b2_ref[0]).astype(out_ref.dtype)


def simple_binary_classifier(x, w1, b1, w2, b2, *, tile_b=2048):
    """Forward pass.

    Args:
      x:  (B, 1, D) float32  -- PyTorch-style input.
      w1: (H, D) float32     -- nn.Linear(D, H).weight (PyTorch layout).
      b1: (H,)   float32
      w2: (1, H) float32     -- nn.Linear(H, 1).weight (PyTorch layout).
      b2: (1,)   float32
    Returns:
      (B,) float32 logits.
    """
    x2d = jnp.squeeze(x, axis=1)                          # (B, D)
    B, D = x2d.shape
    H = w1.shape[0]

    # Batch tile: multiple of 8 (f32 sublanes), capped by tile_b and by
    # ceil(B/2) so the grid has >= 2 parallel steps whenever B > 8 (v7x TCs).
    tb = max(8, min(_round_up(tile_b, 8), _round_up(pl.cdiv(B, 2), 8)))
    grid = (pl.cdiv(B, tb),)   # partial last block handled by Pallas masking

    # One-time weight prep (outside the grid loop): transpose to (D, H) for a
    # standard MXU contraction and cast to bf16 for MXU-native throughput.
    w1_t = jnp.transpose(w1).astype(jnp.bfloat16)         # (D, H)
    b1_r = b1.reshape(1, H).astype(jnp.float32)
    w2_r = w2.reshape(1, H).astype(jnp.float32)
    b2_r = b2.reshape(1).astype(jnp.float32)

    cost = pl.CostEstimate(
        flops=2 * B * D * H + 3 * B * H,
        transcendentals=0,
        bytes_accessed=B * D * 4 + D * H * 2 + 2 * H * 4 + B * 4 + 4,
    )

    out = pl.pallas_call(
        mlp_kernel,
        out_shape=jax.ShapeDtypeStruct((B, 1), jnp.float32),
        grid=grid,
        in_specs=[
            pl.BlockSpec((tb, D), lambda i: (i, 0)),      # x: tiled over batch
            pl.BlockSpec((D, H), lambda i: (0, 0)),       # w1: VMEM-resident
            pl.BlockSpec((1, H), lambda i: (0, 0)),       # b1: resident
            pl.BlockSpec((1, H), lambda i: (0, 0)),       # w2: resident
            pl.BlockSpec(memory_space=pltpu.MemorySpace.SMEM),  # b2 scalar
        ],
        out_specs=pl.BlockSpec((tb, 1), lambda i: (i, 0)),
        compiler_params=pltpu.CompilerParams(
            dimension_semantics=("parallel",),
            vmem_limit_bytes=48 << 20,
        ),
        cost_estimate=cost,
    )(x2d, w1_t, b1_r, w2_r, b2_r)

    return out[:, 0]                                      # (B,)


def init_params(key, input_dim=1024, hidden_dim=256):
    """Deterministic synthetic parameters (PyTorch-Linear-like uniform init)."""
    k1, k2, k3, k4 = jax.random.split(key, 4)
    bound1 = 1.0 / jnp.sqrt(input_dim)
    bound2 = 1.0 / jnp.sqrt(hidden_dim)
    w1 = jax.random.uniform(k1, (hidden_dim, input_dim), jnp.float32,
                            -bound1, bound1)
    b1 = jax.random.uniform(k2, (hidden_dim,), jnp.float32, -bound1, bound1)
    w2 = jax.random.uniform(k3, (1, hidden_dim), jnp.float32, -bound2, bound2)
    b2 = jax.random.uniform(k4, (1,), jnp.float32, -bound2, bound2)
    return w1, b1, w2, b2


if __name__ == "__main__":
    key = jax.random.PRNGKey(0)
    kx, kp = jax.random.split(key)

    # Small demo shapes consistent with the module (input_dim=1024,
    # hidden_dim=256).  B=12 forces tb=8 via the ceil(B/2) cap, so the grid
    # has 2 steps and the masked partial-last-block path is exercised.
    B, D, H = 12, 1024, 256
    x = jax.random.normal(kx, (B, 1, D), dtype=jnp.float32)
    w1, b1, w2, b2 = init_params(kp, input_dim=D, hidden_dim=H)

    fwd = jax.jit(simple_binary_classifier)
    out = jax.block_until_ready(fwd(x, w1, b1, w2, b2))

    # Pure-JAX f32 reference of the forward semantics (kernel matmul runs
    # with bf16 operands / f32 accumulation, hence the looser tolerance).
    x2d = jnp.squeeze(x, axis=1)
    h_ref = jnp.maximum(x2d @ w1.T + b1, 0.0)
    ref = (h_ref @ w2.T + b2).squeeze(1)
    assert out.shape == (B,), out.shape
    assert bool(jnp.allclose(out, ref, atol=2e-2, rtol=2e-2)), (
        jnp.max(jnp.abs(out - ref)))

    print("KERNEL_OK")
</pallas_src>

<mosaic_0001>
module attributes {stable_mosaic.version = 11 : i64} {
  func.func @mlp_kernel(%arg0: i32, %arg1: memref<8x1024xf32, #tpu.memory_space<vmem>>, %arg2: memref<1024x256xbf16, #tpu.memory_space<vmem>>, %arg3: memref<1x256xf32, #tpu.memory_space<vmem>>, %arg4: memref<1x256xf32, #tpu.memory_space<vmem>>, %arg5: memref<1xf32, #tpu.memory_space<smem>>, %arg6: memref<8x1xf32, #tpu.memory_space<vmem>>) attributes {dimension_semantics = [#tpu.dimension_semantics<parallel>], iteration_bounds = array<i64: 2>, scalar_prefetch = 0 : i64, scratch_operands = 0 : i64, tpu.core_type = #tpu.core_type<tc>, window_params = [{transform_indices = @transform_0, window_bounds = array<i64: 8, 1024>}, {pipeline_mode = #tpu.pipeline_mode<synchronous>, transform_indices = @transform_1, window_bounds = array<i64: 1024, 256>}, {pipeline_mode = #tpu.pipeline_mode<synchronous>, transform_indices = @transform_2, window_bounds = array<i64: 1, 256>}, {pipeline_mode = #tpu.pipeline_mode<synchronous>, transform_indices = @transform_3, window_bounds = array<i64: 1, 256>}, {transform_indices = @transform_4, window_bounds = array<i64: 1>}, {transform_indices = @transform_5, window_bounds = array<i64: 8, 1>}]} {
    %c0 = arith.constant 0 : index
    %c0_0 = arith.constant 0 : index
    %0 = vector.load %arg1[%c0, %c0_0] : memref<8x1024xf32, #tpu.memory_space<vmem>>, vector<8x1024xf32>
    %1 = arith.truncf %0 : vector<8x1024xf32> to vector<8x1024xbf16>
    %c0_1 = arith.constant 0 : index
    %c0_2 = arith.constant 0 : index
    %2 = vector.load %arg2[%c0_1, %c0_2] : memref<1024x256xbf16, #tpu.memory_space<vmem>>, vector<1024x256xbf16>
    %cst = arith.constant dense<0.000000e+00> : vector<8x256xf32>
    %3 = tpu.matmul %1, %2, %cst {dimension_numbers = #tpu.dot_dimension_numbers<[1], [0], [0], [1], [0, 0, 1, 1], [], []>} : vector<8x1024xbf16>, vector<1024x256xbf16>, vector<8x256xf32> -> vector<8x256xf32>
    %c0_3 = arith.constant 0 : index
    %c0_4 = arith.constant 0 : index
    %4 = vector.load %arg3[%c0_3, %c0_4] : memref<1x256xf32, #tpu.memory_space<vmem>>, vector<1x256xf32>
    %5 = vector.broadcast %4 : vector<1x256xf32> to vector<8x256xf32>
    %6 = arith.addf %3, %5 : vector<8x256xf32>
    %cst_5 = arith.constant 0.000000e+00 : f32
    %7 = vector.broadcast %cst_5 : f32 to vector<8x256xf32>
    %8 = arith.maximumf %6, %7 : vector<8x256xf32>
    %c0_6 = arith.constant 0 : index
    %c0_7 = arith.constant 0 : index
    %9 = vector.load %arg4[%c0_6, %c0_7] : memref<1x256xf32, #tpu.memory_space<vmem>>, vector<1x256xf32>
    %10 = vector.broadcast %9 : vector<1x256xf32> to vector<8x256xf32>
    %11 = arith.mulf %8, %10 : vector<8x256xf32>
    %cst_8 = arith.constant dense<0.000000e+00> : vector<8xf32>
    %12 = vector.multi_reduction <add>, %11, %cst_8 [1] : vector<8x256xf32> to vector<8xf32>
    %13 = vector.shape_cast %12 : vector<8xf32> to vector<8x1xf32>
    %c0_9 = arith.constant 0 : index
    %14 = memref.load %arg5[%c0_9] : memref<1xf32, #tpu.memory_space<smem>>
    %15 = vector.broadcast %14 : f32 to vector<8x1xf32>
    %16 = arith.addf %13, %15 : vector<8x1xf32>
    %c0_10 = arith.constant 0 : index
    %c0_11 = arith.constant 0 : index
    %17 = vector.load %arg6[%c0_10, %c0_11] : memref<8x1xf32, #tpu.memory_space<vmem>>, vector<8x1xf32>
    tpu.vector_store %arg6[%c0_10, %c0_11], %16 {strides = array<i32>} : memref<8x1xf32, #tpu.memory_space<vmem>>, vector<8x1xf32>,
    return
  }
  func.func @transform_0(%arg0: i32) -> (i32, i32) {
    %c0_i32 = arith.constant 0 : i32
    %c0_i32_0 = arith.constant 0 : i32
    return %arg0, %c0_i32 : i32, i32
  }
  func.func @transform_1(%arg0: i32) -> (i32, i32) {
    %c0_i32 = arith.constant 0 : i32
    %c0_i32_0 = arith.constant 0 : i32
    %c0_i32_1 = arith.constant 0 : i32
    return %c0_i32, %c0_i32_0 : i32, i32
  }
  func.func @transform_2(%arg0: i32) -> (i32, i32) {
    %c0_i32 = arith.constant 0 : i32
    %c0_i32_0 = arith.constant 0 : i32
    %c0_i32_1 = arith.constant 0 : i32
    return %c0_i32, %c0_i32_0 : i32, i32
  }
  func.func @transform_3(%arg0: i32) -> (i32, i32) {
    %c0_i32 = arith.constant 0 : i32
    %c0_i32_0 = arith.constant 0 : i32
    %c0_i32_1 = arith.constant 0 : i32
    return %c0_i32, %c0_i32_0 : i32, i32
  }
  func.func @transform_4(%arg0: i32) -> i32 {
    %c0_i32 = arith.constant 0 : i32
    %c0_i32_0 = arith.constant 0 : i32
    return %c0_i32 : i32
  }
  func.func @transform_5(%arg0: i32) -> (i32, i32) {
    %c0_i32 = arith.constant 0 : i32
    %c0_i32_0 = arith.constant 0 : i32
    return %arg0, %c0_i32 : i32, i32
  }
}

</mosaic_0001>

<llo_original>
// kernel: simple_binary_classifier.1
$region0: #{simple_binary_classifier.1}
  #allocation0 [shape = 'u32[]', space=smem, size = 0x4, offset = 0x4, fixed_abs, tag = 'smem constant byte address 0x4 - core index']
  #allocation1 [shape = 'u32[144,128]{1,0:T(1,128)}', space=vmem, size = 0x12000, scoped, tag = 'internal scratch']
  #allocation2 [shape = 'f32[1]{0:T(128)S(6)}', space=smem, size = 0x200, scoped, tag = 'scoped memory for simple_binary_classifier.1']
  %s0 = inlined_call_operand.vmem [shape: f32[12,1024], index: 0, kind: input, shape index: {}]
  %s1 = inlined_call_operand.vmem [shape: bf16[1024,256], index: 1, kind: input, shape index: {}]
  %s2 = inlined_call_operand.vmem [shape: f32[1,256], index: 2, kind: input, shape index: {}]
  %s3 = inlined_call_operand.vmem [shape: f32[1,256], index: 3, kind: input, shape index: {}]
  %s4 = inlined_call_operand.<no memory space> [shape: f32[1], index: 4, kind: input, shape index: {}]
  %s5 = inlined_call_operand.vmem [shape: f32[12,1], index: 5, kind: output, shape index: {}]
  %s6 = sld [smem:[#allocation0]]
  $region53: #{simple_binary_classifier.1} parent=0
    _
  %s8 = ssub.s32 1, %s6
  %s9 = scalar_select 0, %s8, %s6
  %10 = sst [smem:[#allocation2]] %s4
  loop: start=0, step=1, limit=4
  $region2: #{simple_binary_classifier.1} parent=0 // loop_pre_header
    _
  $region3: #{simple_binary_classifier.1} parent=0 // loop_header
    %s12 = sphi 0, %s16
    %p13 = scmp.ge.s32.totalorder %s12, 4
    %s22 = sphi 0, %s24
    %s25 = sphi 0, %s22
    %s26 = sphi 0, %s25
    %s42 = sphi 0, %s26
    %s46 = sphi 0, %s46
    %s48 = sphi 0, %s46
    %s49 = sphi 0, %s48
    %s63 = sphi 0, %s49
    %s67 = sphi 0, %s67
    %s69 = sphi 0, %s67
    %s70 = sphi 0, %s69
    %s84 = sphi 0, %s70
    %s88 = sphi 0, %s88
    %s90 = sphi 0, %s88
    %s91 = sphi 0, %s90
    %s105 = sphi 0, %s91
    %s109 = sphi 0, %s109
    %s111 = sphi 0, %s109
    %s112 = sphi 0, %s111
    %s126 = sphi 0, %s112
    %s132 = sphi 0, %s134
    %s135 = sphi 0, %s132
    %s136 = sphi 0, %s135
    %s152 = sphi 0, %s136
  $region4: #{simple_binary_classifier.1} parent=0 // loop_header_branch
    %15 = sbr.rel (%p13) target = $region8
  $region5: #{simple_binary_classifier.1} parent=0 // loop_body
    %s17 = ssub.s32 %s12, 1
    %s18 = ssub.s32 %s12, 2
    %s19 = sadd.s32 %s12, 1
    %s20 = ssub.s32 %s12, %s19
    %p21 = scmp.eq.s32.totalorder %s20, 0
    %s23 = sadd.s32 %s22, 1
    %s24 = scalar_select %p21, %s22, %s23
    %p27 = pneg %p21
    %p28 = scmp.eq.s32.totalorder %s12, 1
    %p29 = por %p27, %p28
    %p30 = scmp.ne.s32.totalorder %s22, %s25
    %p31 = scmp.eq.s32.totalorder %s12, 0
    %p32 = por %p30, %p31
    %p33 = scmp.ne.s32.totalorder %s22, %s25
    %p34 = scmp.eq.s32.totalorder %s17, 1
    %p35 = por %p33, %p34
    %p36 = scmp.ne.s32.totalorder %s25, %s26
    %p37 = scmp.eq.s32.totalorder %s17, 0
    %p38 = por %p36, %p37
    %p39 = scmp.ne.s32.totalorder %s25, %s26
    %p40 = scmp.eq.s32.totalorder %s18, 1
    %p41 = por %p39, %p40
    %p43 = scmp.ne.s32.totalorder %s26, %s42
    %p44 = scmp.eq.s32.totalorder %s18, 0
    %p45 = por %p43, %p44
    %s47 = sadd.s32 %s46, 1
    %p50 = scmp.eq.s32.totalorder %s12, 1
    %p51 = scmp.ne.s32.totalorder %s46, %s48
    %p52 = scmp.eq.s32.totalorder %s12, 0
    %p53 = por %p51, %p52
    %p54 = scmp.ne.s32.totalorder %s46, %s48
    %p55 = scmp.eq.s32.totalorder %s17, 1
    %p56 = por %p54, %p55
    %p57 = scmp.ne.s32.totalorder %s48, %s49
    %p58 = scmp.eq.s32.totalorder %s17, 0
    %p59 = por %p57, %p58
    %p60 = scmp.ne.s32.totalorder %s48, %s49
    %p61 = scmp.eq.s32.totalorder %s18, 1
    %p62 = por %p60, %p61
    %p64 = scmp.ne.s32.totalorder %s49, %s63
    %p65 = scmp.eq.s32.totalorder %s18, 0
    %p66 = por %p64, %p65
    %s68 = sadd.s32 %s67, 1
    %p71 = scmp.eq.s32.totalorder %s12, 1
    %p72 = scmp.ne.s32.totalorder %s67, %s69
    %p73 = scmp.eq.s32.totalorder %s12, 0
    %p74 = por %p72, %p73
    %p75 = scmp.ne.s32.totalorder %s67, %s69
    %p76 = scmp.eq.s32.totalorder %s17, 1
    %p77 = por %p75, %p76
    %p78 = scmp.ne.s32.totalorder %s69, %s70
    %p79 = scmp.eq.s32.totalorder %s17, 0
    %p80 = por %p78, %p79
    %p81 = scmp.ne.s32.totalorder %s69, %s70
    %p82 = scmp.eq.s32.totalorder %s18, 1
    %p83 = por %p81, %p82
    %p85 = scmp.ne.s32.totalorder %s70, %s84
    %p86 = scmp.eq.s32.totalorder %s18, 0
    %p87 = por %p85, %p86
    %s89 = sadd.s32 %s88, 1
    %p92 = scmp.eq.s32.totalorder %s12, 1
    %p93 = scmp.ne.s32.totalorder %s88, %s90
    %p94 = scmp.eq.s32.totalorder %s12, 0
    %p95 = por %p93, %p94
    %p96 = scmp.ne.s32.totalorder %s88, %s90
    %p97 = scmp.eq.s32.totalorder %s17, 1
    %p98 = por %p96, %p97
    %p99 = scmp.ne.s32.totalorder %s90, %s91
    %p100 = scmp.eq.s32.totalorder %s17, 0
    %p101 = por %p99, %p100
    %p102 = scmp.ne.s32.totalorder %s90, %s91
    %p103 = scmp.eq.s32.totalorder %s18, 1
    %p104 = por %p102, %p103
    %p106 = scmp.ne.s32.totalorder %s91, %s105
    %p107 = scmp.eq.s32.totalorder %s18, 0
    %p108 = por %p106, %p107
    %s110 = sadd.s32 %s109, 1
    %p113 = scmp.eq.s32.totalorder %s12, 1
    %p114 = scmp.ne.s32.totalorder %s109, %s111
    %p115 = scmp.eq.s32.totalorder %s12, 0
    %p116 = por %p114, %p115
    %p117 = scmp.ne.s32.totalorder %s109, %s111
    %p118 = scmp.eq.s32.totalorder %s17, 1
    %p119 = por %p117, %p118
    %p120 = scmp.ne.s32.totalorder %s111, %s112
    %p121 = scmp.eq.s32.totalorder %s17, 0
    %p122 = por %p120, %p121
    %p123 = scmp.ne.s32.totalorder %s111, %s112
    %p124 = scmp.eq.s32.totalorder %s18, 1
    %p125 = por %p123, %p124
    %p127 = scmp.ne.s32.totalorder %s112, %s126
    %p128 = scmp.eq.s32.totalorder %s18, 0
    %p129 = por %p127, %p128
    %s130 = ssub.s32 %s12, %s19
    %p131 = scmp.eq.s32.totalorder %s130, 0
    %s133 = sadd.s32 %s132, 1
    %s134 = scalar_select %p131, %s132, %s133
    %p137 = pneg %p131
    %p138 = scmp.eq.s32.totalorder %s12, 1
    %p139 = por %p137, %p138
    %p140 = scmp.ne.s32.totalorder %s132, %s135
    %p141 = scmp.eq.s32.totalorder %s12, 0
    %p142 = por %p140, %p141
    %p143 = scmp.ne.s32.totalorder %s132, %s135
    %p144 = scmp.eq.s32.totalorder %s17, 1
    %p145 = por %p143, %p144
    %p146 = scmp.ne.s32.totalorder %s135, %s136
    %p147 = scmp.eq.s32.totalorder %s17, 0
    %p148 = por %p146, %p147
    %p149 = scmp.ne.s32.totalorder %s135, %s136
    %p150 = scmp.eq.s32.totalorder %s18, 1
    %p151 = por %p149, %p150
    %p153 = scmp.ne.s32.totalorder %s136, %s152
    %p154 = scmp.eq.s32.totalorder %s18, 0
    %p155 = por %p153, %p154
    %p156 = scmp.le.s32.totalorder 1, %s12
    %p157 = scmp.lt.s32.totalorder %s12, 3
    %p158 = pnand %p156, %p157
    %p159 = pneg %p158
    // Predicated region
    $region9: #{simple_binary_classifier.1} parent=5 // pred_check
      _
    $region10: #{simple_binary_classifier.1} parent=5 // pred_check_branch
      %161 = sbr.rel (%p158) target = $region12
    $region11: #{simple_binary_classifier.1} parent=5 // pred_region
      %s162 = ssub.s32 %s12, 1
      // Predicated region
      $region13: #{simple_binary_classifier.1} parent=11 // pred_check
        %p163 = pneg %p59
      $region14: #{simple_binary_classifier.1} parent=11 // pred_check_branch
        %165 = sbr.rel (%p163) target = $region16
      $region15: #{simple_binary_classifier.1} parent=11 // pred_region
        _
      $region16: #{simple_binary_classifier.1} parent=11 // pred_fallthru
        _
      // Predicated region
      $region17: #{simple_binary_classifier.1} parent=11 // pred_check
        %p166 = pneg %p80
      $region18: #{simple_binary_classifier.1} parent=11 // pred_check_branch
        %168 = sbr.rel (%p166) target = $region20
      $region19: #{simple_binary_classifier.1} parent=11 // pred_region
        _
      $region20: #{simple_binary_classifier.1} parent=11 // pred_fallthru
        _
      // Predicated region
      $region21: #{simple_binary_classifier.1} parent=11 // pred_check
        %p169 = pneg %p101
      $region22: #{simple_binary_classifier.1} parent=11 // pred_check_branch
        %171 = sbr.rel (%p169) target = $region24
      $region23: #{simple_binary_classifier.1} parent=11 // pred_region
        _
      $region24: #{simple_binary_classifier.1} parent=11 // pred_fallthru
        _
      // Predicated region
      $region25: #{simple_binary_classifier.1} parent=11 // pred_check
        %p172 = pneg %p122
      $region26: #{simple_binary_classifier.1} parent=11 // pred_check_branch
        %174 = sbr.rel (%p172) target = $region28
      $region27: #{simple_binary_classifier.1} parent=11 // pred_region
        _
      $region28: #{simple_binary_classifier.1} parent=11 // pred_fallthru
        _
    $region12: #{simple_binary_classifier.1} parent=5 // pred_fallthru
      _
    %p175 = scmp.lt.s32.totalorder %s12, 2
    // Predicated region
    $region29: #{simple_binary_classifier.1} parent=5 // pred_check
      %p176 = pneg %p175
    $region30: #{simple_binary_classifier.1} parent=5 // pred_check_branch
      %178 = sbr.rel (%p176) target = $region32
    $region31: #{simple_binary_classifier.1} parent=5 // pred_region
      // Predicated region
      $region33: #{simple_binary_classifier.1} parent=31 // pred_check
        %p179 = pneg %p32
      $region34: #{simple_binary_classifier.1} parent=31 // pred_check_branch
        %181 = sbr.rel (%p179) target = $region36
      $region35: #{simple_binary_classifier.1} parent=31 // pred_region
        %p182 = scmp.lt.s32.totalorder %s12, 1
        %s183 = scalar_select %p182, %s12, 1
        %s184 = smul.addr %s183, 8
        %s185 = smul.addr %s184, 8
        %s186 = scalar_lea.vmem %s0, %s185
      $region36: #{simple_binary_classifier.1} parent=31 // pred_fallthru
        _
    $region32: #{simple_binary_classifier.1} parent=5 // pred_fallthru
      _
    %p187 = scmp.le.s32.totalorder 1, %s12
    %p188 = scmp.lt.s32.totalorder %s12, 3
    %p189 = pnand %p187, %p188
    %p190 = pneg %p189
    // Predicated region
    $region37: #{simple_binary_classifier.1} parent=5 // pred_check
      _
    $region38: #{simple_binary_classifier.1} parent=5 // pred_check_branch
      %192 = sbr.rel (%p189) target = $region40
    $region39: #{simple_binary_classifier.1} parent=5 // pred_region
      %s193 = ssub.s32 %s12, 1
      %p194 = scmp.lt.s32.totalorder %s17, 1
      %s195 = scalar_select %p194, %s17, 1
      %s196 = smul.addr %s195, 8
      %s197 = smul.addr %s196, 8
      %s198 = scalar_lea.vmem %s0, %s197
      %p199 = pneg %p38
      %p200 = pneg %p35
      %p201 = pneg %p59
      %p202 = pneg %p56
      %p203 = pneg %p80
      %p204 = pneg %p77
      %p205 = pneg %p101
      %p206 = pneg %p98
      %p207 = pneg %p122
      %p208 = pneg %p119
      %p209 = pneg %p148
      %p210 = pneg %p145
      %p211 = scmp.lt.s32.totalorder %s17, 1
      %s212 = scalar_select %p211, %s17, 1
      %s213 = smul.addr %s212, 8
      %s214 = scalar_lea.vmem %s5, %s213
      %p215 = scmp.lt.s32.totalorder %s17, 1
      %s216 = scalar_select %p215, %s17, 1
      %s217 = smul.addr %s216, 8
      %s218 = smul.addr %s217, 8
      %s219 = scalar_lea.vmem %s0, %s218
      %p220 = scmp.lt.s32.totalorder %s17, 1
      %s221 = scalar_select %p220, %s17, 1
      %s222 = smul.addr %s221, 8
      %s223 = scalar_lea.vmem %s5, %s222
      %v224 = vld [vmem:[%s219] sm:$0xff]
      %v225 = vld [vmem:[%s219 + $0x8] sm:$0xff]
      %v226 = vld [vmem:[%s219 + $0x10] sm:$0xff]
      %v227 = vld [vmem:[%s219 + $0x18] sm:$0xff]
      %v228 = vld [vmem:[%s219 + $0x20] sm:$0xff]
      %v229 = vld [vmem:[%s219 + $0x28] sm:$0xff]
      %v230 = vld [vmem:[%s219 + $0x30] sm:$0xff]
      %v231 = vld [vmem:[%s219 + $0x38] sm:$0xff]
      %v232 = vpack.c.bf16 %v224, %v224
      %v233 = vpack.c.bf16 %v225, %v225
      %v234 = vpack.c.bf16 %v226, %v226
      %v235 = vpack.c.bf16 %v227, %v227
      %v236 = vpack.c.bf16 %v228, %v228
      %v237 = vpack.c.bf16 %v229, %v229
      %v238 = vpack.c.bf16 %v230, %v230
      %v239 = vpack.c.bf16 %v231, %v231
      %v240 = vld [vmem:[%s1] sm:$0xff]
      %v241 = vld [vmem:[%s1 + $0x8] sm:$0xff]
      %v242 = vld [vmem:[%s1 + $0x10] sm:$0xff]
      %v243 = vld [vmem:[%s1 + $0x18] sm:$0xff]
      %v244 = vld [vmem:[%s1 + $0x20] sm:$0xff]
      %v245 = vld [vmem:[%s1 + $0x28] sm:$0xff]
      %v246 = vld [vmem:[%s1 + $0x30] sm:$0xff]
      %v247 = vld [vmem:[%s1 + $0x38] sm:$0xff]
      %v248 = vld [vmem:[%s1 + $0x40] sm:$0xff]
      %v249 = vld [vmem:[%s1 + $0x48] sm:$0xff]
      %v250 = vld [vmem:[%s1 + $0x50] sm:$0xff]
      %v251 = vld [vmem:[%s1 + $0x58] sm:$0xff]
      %v252 = vld [vmem:[%s1 + $0x60] sm:$0xff]
      %v253 = vld [vmem:[%s1 + $0x68] sm:$0xff]
      %v254 = vld [vmem:[%s1 + $0x70] sm:$0xff]
      %v255 = vld [vmem:[%s1 + $0x78] sm:$0xff]
      %v256 = vld [vmem:[%s1 + $0x80] sm:$0xff]
      %v257 = vld [vmem:[%s1 + $0x88] sm:$0xff]
      %v258 = vld [vmem:[%s1 + $0x90] sm:$0xff]
      %v259 = vld [vmem:[%s1 + $0x98] sm:$0xff]
      %v260 = vld [vmem:[%s1 + $0xa0] sm:$0xff]
      %v261 = vld [vmem:[%s1 + $0xa8] sm:$0xff]
      %v262 = vld [vmem:[%s1 + $0xb0] sm:$0xff]
      %v263 = vld [vmem:[%s1 + $0xb8] sm:$0xff]
      %v264 = vld [vmem:[%s1 + $0xc0] sm:$0xff]
      %v265 = vld [vmem:[%s1 + $0xc8] sm:$0xff]
      %v266 = vld [vmem:[%s1 + $0xd0] sm:$0xff]
      %v267 = vld [vmem:[%s1 + $0xd8] sm:$0xff]
      %v268 = vld [vmem:[%s1 + $0xe0] sm:$0xff]
      %v269 = vld [vmem:[%s1 + $0xe8] sm:$0xff]
      %v270 = vld [vmem:[%s1 + $0xf0] sm:$0xff]
      %v271 = vld [vmem:[%s1 + $0xf8] sm:$0xff]
      %v272 = vld [vmem:[%s1 + $0x100] sm:$0xff]
      %v273 = vld [vmem:[%s1 + $0x108] sm:$0xff]
      %v274 = vld [vmem:[%s1 + $0x110] sm:$0xff]
      %v275 = vld [vmem:[%s1 + $0x118] sm:$0xff]
      %v276 = vld [vmem:[%s1 + $0x120] sm:$0xff]
      %v277 = vld [vmem:[%s1 + $0x128] sm:$0xff]
      %v278 = vld [vmem:[%s1 + $0x130] sm:$0xff]
      %v279 = vld [vmem:[%s1 + $0x138] sm:$0xff]
      %v280 = vld [vmem:[%s1 + $0x140] sm:$0xff]
      %v281 = vld [vmem:[%s1 + $0x148] sm:$0xff]
      %v282 = vld [vmem:[%s1 + $0x150] sm:$0xff]
      %v283 = vld [vmem:[%s1 + $0x158] sm:$0xff]
      %v284 = vld [vmem:[%s1 + $0x160] sm:$0xff]
      %v285 = vld [vmem:[%s1 + $0x168] sm:$0xff]
      %v286 = vld [vmem:[%s1 + $0x170] sm:$0xff]
      %v287 = vld [vmem:[%s1 + $0x178] sm:$0xff]
      %v288 = vld [vmem:[%s1 + $0x180] sm:$0xff]
      %v289 = vld [vmem:[%s1 + $0x188] sm:$0xff]
      %v290 = vld [vmem:[%s1 + $0x190] sm:$0xff]
      %v291 = vld [vmem:[%s1 + $0x198] sm:$0xff]
      %v292 = vld [vmem:[%s1 + $0x1a0] sm:$0xff]
      %v293 = vld [vmem:[%s1 + $0x1a8] sm:$0xff]
      %v294 = vld [vmem:[%s1 + $0x1b0] sm:$0xff]
      %v295 = vld [vmem:[%s1 + $0x1b8] sm:$0xff]
      %v296 = vld [vmem:[%s1 + $0x1c0] sm:$0xff]
      %v297 = vld [vmem:[%s1 + $0x1c8] sm:$0xff]
      %v298 = vld [vmem:[%s1 + $0x1d0] sm:$0xff]
      %v299 = vld [vmem:[%s1 + $0x1d8] sm:$0xff]
      %v300 = vld [vmem:[%s1 + $0x1e0] sm:$0xff]
      %v301 = vld [vmem:[%s1 + $0x1e8] sm:$0xff]
      %v302 = vld [vmem:[%s1 + $0x1f0] sm:$0xff]
      %v303 = vld [vmem:[%s1 + $0x1f8] sm:$0xff]
      %v304 = vld [vmem:[%s1 + $0x200] sm:$0xff]
      %v305 = vld [vmem:[%s1 + $0x208] sm:$0xff]
      %v306 = vld [vmem:[%s1 + $0x210] sm:$0xff]
      %v307 = vld [vmem:[%s1 + $0x218] sm:$0xff]
      %v308 = vld [vmem:[%s1 + $0x220] sm:$0xff]
      %v309 = vld [vmem:[%s1 + $0x228] sm:$0xff]
      %v310 = vld [vmem:[%s1 + $0x230] sm:$0xff]
      %v311 = vld [vmem:[%s1 + $0x238] sm:$0xff]
      %v312 = vld [vmem:[%s1 + $0x240] sm:$0xff]
      %v313 = vld [vmem:[%s1 + $0x248] sm:$0xff]
      %v314 = vld [vmem:[%s1 + $0x250] sm:$0xff]
      %v315 = vld [vmem:[%s1 + $0x258] sm:$0xff]
      %v316 = vld [vmem:[%s1 + $0x260] sm:$0xff]
      %v317 = vld [vmem:[%s1 + $0x268] sm:$0xff]
      %v318 = vld [vmem:[%s1 + $0x270] sm:$0xff]
      %v319 = vld [vmem:[%s1 + $0x278] sm:$0xff]
      %v320 = vld [vmem:[%s1 + $0x280] sm:$0xff]
      %v321 = vld [vmem:[%s1 + $0x288] sm:$0xff]
      %v322 = vld [vmem:[%s1 + $0x290] sm:$0xff]
      %v323 = vld [vmem:[%s1 + $0x298] sm:$0xff]
      %v324 = vld [vmem:[%s1 + $0x2a0] sm:$0xff]
      %v325 = vld [vmem:[%s1 + $0x2a8] sm:$0xff]
      %v326 = vld [vmem:[%s1 + $0x2b0] sm:$0xff]
      %v327 = vld [vmem:[%s1 + $0x2b8] sm:$0xff]
      %v328 = vld [vmem:[%s1 + $0x2c0] sm:$0xff]
      %v329 = vld [vmem:[%s1 + $0x2c8] sm:$0xff]
      %v330 = vld [vmem:[%s1 + $0x2d0] sm:$0xff]
      %v331 = vld [vmem:[%s1 + $0x2d8] sm:$0xff]
      %v332 = vld [vmem:[%s1 + $0x2e0] sm:$0xff]
      %v333 = vld [vmem:[%s1 + $0x2e8] sm:$0xff]
      %v334 = vld [vmem:[%s1 + $0x2f0] sm:$0xff]
      %v335 = vld [vmem:[%s1 + $0x2f8] sm:$0xff]
      %v336 = vld [vmem:[%s1 + $0x300] sm:$0xff]
      %v337 = vld [vmem:[%s1 + $0x308] sm:$0xff]
      %v338 = vld [vmem:[%s1 + $0x310] sm:$0xff]
      %v339 = vld [vmem:[%s1 + $0x318] sm:$0xff]
      %v340 = vld [vmem:[%s1 + $0x320] sm:$0xff]
      %v341 = vld [vmem:[%s1 + $0x328] sm:$0xff]
      %v342 = vld [vmem:[%s1 + $0x330] sm:$0xff]
      %v343 = vld [vmem:[%s1 + $0x338] sm:$0xff]
      %v344 = vld [vmem:[%s1 + $0x340] sm:$0xff]
      %v345 = vld [vmem:[%s1 + $0x348] sm:$0xff]
      %v346 = vld [vmem:[%s1 + $0x350] sm:$0xff]
      %v347 = vld [vmem:[%s1 + $0x358] sm:$0xff]
      %v348 = vld [vmem:[%s1 + $0x360] sm:$0xff]
      %v349 = vld [vmem:[%s1 + $0x368] sm:$0xff]
      %v350 = vld [vmem:[%s1 + $0x370] sm:$0xff]
      %v351 = vld [vmem:[%s1 + $0x378] sm:$0xff]
      %v352 = vld [vmem:[%s1 + $0x380] sm:$0xff]
      %v353 = vld [vmem:[%s1 + $0x388] sm:$0xff]
      %v354 = vld [vmem:[%s1 + $0x390] sm:$0xff]
      %v355 = vld [vmem:[%s1 + $0x398] sm:$0xff]
      %v356 = vld [vmem:[%s1 + $0x3a0] sm:$0xff]
      %v357 = vld [vmem:[%s1 + $0x3a8] sm:$0xff]
      %v358 = vld [vmem:[%s1 + $0x3b0] sm:$0xff]
      %v359 = vld [vmem:[%s1 + $0x3b8] sm:$0xff]
      %v360 = vld [vmem:[%s1 + $0x3c0] sm:$0xff]
      %v361 = vld [vmem:[%s1 + $0x3c8] sm:$0xff]
      %v362 = vld [vmem:[%s1 + $0x3d0] sm:$0xff]
      %v363 = vld [vmem:[%s1 + $0x3d8] sm:$0xff]
      %v364 = vld [vmem:[%s1 + $0x3e0] sm:$0xff]
      %v365 = vld [vmem:[%s1 + $0x3e8] sm:$0xff]
      %v366 = vld [vmem:[%s1 + $0x3f0] sm:$0xff]
      %v367 = vld [vmem:[%s1 + $0x3f8] sm:$0xff]
      %v368 = vld [vmem:[%s2] sm:$0x3]
      %v370 = vlaneseq
      %v371 = vshrl.u32 %v370, 7
      %v372 = vsub.s32 0, %v371
      %v373 = vrot.slane %v368, %v372
      %v374 = vlaneseq
      %v375 = vshrl.u32 %v374, 7
      %v376 = vsub.s32 1, %v375
      %v377 = vrot.slane %v368, %v376
      %v508 = vunpack.c.l.b16 %v240
      %v509 = vunpack.c.h.b16 %v240
      %v510 = vunpack.c.l.b16 %v241
      %v511 = vunpack.c.h.b16 %v241
      %v512 = vunpack.c.l.b16 %v242
      %v513 = vunpack.c.h.b16 %v242
      %v514 = vunpack.c.l.b16 %v243
      %v515 = vunpack.c.h.b16 %v243
      %v516 = vunpack.c.l.b16 %v244
      %v517 = vunpack.c.h.b16 %v244
      %v518 = vunpack.c.l.b16 %v245
      %v519 = vunpack.c.h.b16 %v245
      %v520 = vunpack.c.l.b16 %v246
      %v521 = vunpack.c.h.b16 %v246
      %v522 = vunpack.c.l.b16 %v247
      %v523 = vunpack.c.h.b16 %v247
      %v524 = vunpack.c.l.b16 %v248
      %v525 = vunpack.c.h.b16 %v248
      %v526 = vunpack.c.l.b16 %v249
      %v527 = vunpack.c.h.b16 %v249
      %v528 = vunpack.c.l.b16 %v250
      %v529 = vunpack.c.h.b16 %v250
      %v530 = vunpack.c.l.b16 %v251
      %v531 = vunpack.c.h.b16 %v251
      %v532 = vunpack.c.l.b16 %v252
      %v533 = vunpack.c.h.b16 %v252
      %v534 = vunpack.c.l.b16 %v253
      %v535 = vunpack.c.h.b16 %v253
      %v536 = vunpack.c.l.b16 %v254
      %v537 = vunpack.c.h.b16 %v254
      %v538 = vunpack.c.l.b16 %v255
      %v539 = vunpack.c.h.b16 %v255
      %v540 = vunpack.c.l.b16 %v256
      %v541 = vunpack.c.h.b16 %v256
      %v542 = vunpack.c.l.b16 %v257
      %v543 = vunpack.c.h.b16 %v257
      %v544 = vunpack.c.l.b16 %v258
      %v545 = vunpack.c.h.b16 %v258
      %v546 = vunpack.c.l.b16 %v259
      %v547 = vunpack.c.h.b16 %v259
      %v548 = vunpack.c.l.b16 %v260
      %v549 = vunpack.c.h.b16 %v260
      %v550 = vunpack.c.l.b16 %v261
      %v551 = vunpack.c.h.b16 %v261
      %v552 = vunpack.c.l.b16 %v262
      %v553 = vunpack.c.h.b16 %v262
      %v554 = vunpack.c.l.b16 %v263
      %v555 = vunpack.c.h.b16 %v263
      %v556 = vunpack.c.l.b16 %v264
      %v557 = vunpack.c.h.b16 %v264
      %v558 = vunpack.c.l.b16 %v265
      %v559 = vunpack.c.h.b16 %v265
      %v560 = vunpack.c.l.b16 %v266
      %v561 = vunpack.c.h.b16 %v266
      %v562 = vunpack.c.l.b16 %v267
      %v563 = vunpack.c.h.b16 %v267
      %v564 = vunpack.c.l.b16 %v268
      %v565 = vunpack.c.h.b16 %v268
      %v566 = vunpack.c.l.b16 %v269
      %v567 = vunpack.c.h.b16 %v269
      %v568 = vunpack.c.l.b16 %v270
      %v569 = vunpack.c.h.b16 %v270
      %v570 = vunpack.c.l.b16 %v271
      %v571 = vunpack.c.h.b16 %v271
      %v572 = vunpack.c.l.b16 %v272
      %v573 = vunpack.c.h.b16 %v272
      %v574 = vunpack.c.l.b16 %v273
      %v575 = vunpack.c.h.b16 %v273
      %v576 = vunpack.c.l.b16 %v274
      %v577 = vunpack.c.h.b16 %v274
      %v578 = vunpack.c.l.b16 %v275
      %v579 = vunpack.c.h.b16 %v275
      %v580 = vunpack.c.l.b16 %v276
      %v581 = vunpack.c.h.b16 %v276
      %v582 = vunpack.c.l.b16 %v277
      %v583 = vunpack.c.h.b16 %v277
      %v584 = vunpack.c.l.b16 %v278
      %v585 = vunpack.c.h.b16 %v278
      %v586 = vunpack.c.l.b16 %v279
      %v587 = vunpack.c.h.b16 %v279
      %v588 = vunpack.c.l.b16 %v280
      %v589 = vunpack.c.h.b16 %v280
      %v590 = vunpack.c.l.b16 %v281
      %v591 = vunpack.c.h.b16 %v281
      %v592 = vunpack.c.l.b16 %v282
      %v593 = vunpack.c.h.b16 %v282
      %v594 = vunpack.c.l.b16 %v283
      %v595 = vunpack.c.h.b16 %v283
      %v596 = vunpack.c.l.b16 %v284
      %v597 = vunpack.c.h.b16 %v284
      %v598 = vunpack.c.l.b16 %v285
      %v599 = vunpack.c.h.b16 %v285
      %v600 = vunpack.c.l.b16 %v286
      %v601 = vunpack.c.h.b16 %v286
      %v602 = vunpack.c.l.b16 %v287
      %v603 = vunpack.c.h.b16 %v287
      %v604 = vunpack.c.l.b16 %v288
      %v605 = vunpack.c.h.b16 %v288
      %v606 = vunpack.c.l.b16 %v289
      %v607 = vunpack.c.h.b16 %v289
      %v608 = vunpack.c.l.b16 %v290
      %v609 = vunpack.c.h.b16 %v290
      %v610 = vunpack.c.l.b16 %v291
      %v611 = vunpack.c.h.b16 %v291
      %v612 = vunpack.c.l.b16 %v292
      %v613 = vunpack.c.h.b16 %v292
      %v614 = vunpack.c.l.b16 %v293
      %v615 = vunpack.c.h.b16 %v293
      %v616 = vunpack.c.l.b16 %v294
      %v617 = vunpack.c.h.b16 %v294
      %v618 = vunpack.c.l.b16 %v295
      %v619 = vunpack.c.h.b16 %v295
      %v620 = vunpack.c.l.b16 %v296
      %v621 = vunpack.c.h.b16 %v296
      %v622 = vunpack.c.l.b16 %v297
      %v623 = vunpack.c.h.b16 %v297
      %v624 = vunpack.c.l.b16 %v298
      %v625 = vunpack.c.h.b16 %v298
      %v626 = vunpack.c.l.b16 %v299
      %v627 = vunpack.c.h.b16 %v299
      %v628 = vunpack.c.l.b16 %v300
      %v629 = vunpack.c.h.b16 %v300
      %v630 = vunpack.c.l.b16 %v301
      %v631 = vunpack.c.h.b16 %v301
      %v632 = vunpack.c.l.b16 %v302
      %v633 = vunpack.c.h.b16 %v302
      %v634 = vunpack.c.l.b16 %v303
      %v635 = vunpack.c.h.b16 %v303
      %v636 = vunpack.c.l.b16 %v304
      %v637 = vunpack.c.h.b16 %v304
      %v638 = vunpack.c.l.b16 %v305
      %v639 = vunpack.c.h.b16 %v305
      %v640 = vunpack.c.l.b16 %v306
      %v641 = vunpack.c.h.b16 %v306
      %v642 = vunpack.c.l.b16 %v307
      %v643 = vunpack.c.h.b16 %v307
      %v644 = vunpack.c.l.b16 %v308
      %v645 = vunpack.c.h.b16 %v308
      %v646 = vunpack.c.l.b16 %v309
      %v647 = vunpack.c.h.b16 %v309
      %v648 = vunpack.c.l.b16 %v310
      %v649 = vunpack.c.h.b16 %v310
      %v650 = vunpack.c.l.b16 %v311
      %v651 = vunpack.c.h.b16 %v311
      %v652 = vunpack.c.l.b16 %v312
      %v653 = vunpack.c.h.b16 %v312
      %v654 = vunpack.c.l.b16 %v313
      %v655 = vunpack.c.h.b16 %v313
      %v656 = vunpack.c.l.b16 %v314
      %v657 = vunpack.c.h.b16 %v314
      %v658 = vunpack.c.l.b16 %v315
      %v659 = vunpack.c.h.b16 %v315
      %v660 = vunpack.c.l.b16 %v316
      %v661 = vunpack.c.h.b16 %v316
      %v662 = vunpack.c.l.b16 %v317
      %v663 = vunpack.c.h.b16 %v317
      %v664 = vunpack.c.l.b16 %v318
      %v665 = vunpack.c.h.b16 %v318
      %v666 = vunpack.c.l.b16 %v319
      %v667 = vunpack.c.h.b16 %v319
      %v668 = vunpack.c.l.b16 %v320
      %v669 = vunpack.c.h.b16 %v320
      %v670 = vunpack.c.l.b16 %v321
      %v671 = vunpack.c.h.b16 %v321
      %v672 = vunpack.c.l.b16 %v322
      %v673 = vunpack.c.h.b16 %v322
      %v674 = vunpack.c.l.b16 %v323
      %v675 = vunpack.c.h.b16 %v323
      %v676 = vunpack.c.l.b16 %v324
      %v677 = vunpack.c.h.b16 %v324
      %v678 = vunpack.c.l.b16 %v325
      %v679 = vunpack.c.h.b16 %v325
      %v680 = vunpack.c.l.b16 %v326
      %v681 = vunpack.c.h.b16 %v326
      %v682 = vunpack.c.l.b16 %v327
      %v683 = vunpack.c.h.b16 %v327
      %v684 = vunpack.c.l.b16 %v328
      %v685 = vunpack.c.h.b16 %v328
      %v686 = vunpack.c.l.b16 %v329
      %v687 = vunpack.c.h.b16 %v329
      %v688 = vunpack.c.l.b16 %v330
      %v689 = vunpack.c.h.b16 %v330
      %v690 = vunpack.c.l.b16 %v331
      %v691 = vunpack.c.h.b16 %v331
      %v692 = vunpack.c.l.b16 %v332
      %v693 = vunpack.c.h.b16 %v332
      %v694 = vunpack.c.l.b16 %v333
      %v695 = vunpack.c.h.b16 %v333
      %v696 = vunpack.c.l.b16 %v334
      %v697 = vunpack.c.h.b16 %v334
      %v698 = vunpack.c.l.b16 %v335
      %v699 = vunpack.c.h.b16 %v335
      %v700 = vunpack.c.l.b16 %v336
      %v701 = vunpack.c.h.b16 %v336
      %v702 = vunpack.c.l.b16 %v337
      %v703 = vunpack.c.h.b16 %v337
      %v704 = vunpack.c.l.b16 %v338
      %v705 = vunpack.c.h.b16 %v338
      %v706 = vunpack.c.l.b16 %v339
      %v707 = vunpack.c.h.b16 %v339
      %v708 = vunpack.c.l.b16 %v340
      %v709 = vunpack.c.h.b16 %v340
      %v710 = vunpack.c.l.b16 %v341
      %v711 = vunpack.c.h.b16 %v341
      %v712 = vunpack.c.l.b16 %v342
      %v713 = vunpack.c.h.b16 %v342
      %v714 = vunpack.c.l.b16 %v343
      %v715 = vunpack.c.h.b16 %v343
      %v716 = vunpack.c.l.b16 %v344
      %v717 = vunpack.c.h.b16 %v344
      %v718 = vunpack.c.l.b16 %v345
      %v719 = vunpack.c.h.b16 %v345
      %v720 = vunpack.c.l.b16 %v346
      %v721 = vunpack.c.h.b16 %v346
      %v722 = vunpack.c.l.b16 %v347
      %v723 = vunpack.c.h.b16 %v347
      %v724 = vunpack.c.l.b16 %v348
      %v725 = vunpack.c.h.b16 %v348
      %v726 = vunpack.c.l.b16 %v349
      %v727 = vunpack.c.h.b16 %v349
      %v728 = vunpack.c.l.b16 %v350
      %v729 = vunpack.c.h.b16 %v350
      %v730 = vunpack.c.l.b16 %v351
      %v731 = vunpack.c.h.b16 %v351
      %v732 = vunpack.c.l.b16 %v352
      %v733 = vunpack.c.h.b16 %v352
      %v734 = vunpack.c.l.b16 %v353
      %v735 = vunpack.c.h.b16 %v353
      %v736 = vunpack.c.l.b16 %v354
      %v737 = vunpack.c.h.b16 %v354
      %v738 = vunpack.c.l.b16 %v355
      %v739 = vunpack.c.h.b16 %v355
      %v740 = vunpack.c.l.b16 %v356
      %v741 = vunpack.c.h.b16 %v356
      %v742 = vunpack.c.l.b16 %v357
      %v743 = vunpack.c.h.b16 %v357
      %v744 = vunpack.c.l.b16 %v358
      %v745 = vunpack.c.h.b16 %v358
      %v746 = vunpack.c.l.b16 %v359
      %v747 = vunpack.c.h.b16 %v359
      %v748 = vunpack.c.l.b16 %v360
      %v749 = vunpack.c.h.b16 %v360
      %v750 = vunpack.c.l.b16 %v361
      %v751 = vunpack.c.h.b16 %v361
      %v752 = vunpack.c.l.b16 %v362
      %v753 = vunpack.c.h.b16 %v362
      %v754 = vunpack.c.l.b16 %v363
      %v755 = vunpack.c.h.b16 %v363
      %v756 = vunpack.c.l.b16 %v364
      %v757 = vunpack.c.h.b16 %v364
      %v758 = vunpack.c.l.b16 %v365
      %v759 = vunpack.c.h.b16 %v365
      %v760 = vunpack.c.l.b16 %v366
      %v761 = vunpack.c.h.b16 %v366
      %v762 = vunpack.c.l.b16 %v367
      %v763 = vunpack.c.h.b16 %v367
      %v764 = vpack.c.b16 %v510, %v508
      %v765 = vpack.c.b16 %v511, %v509
      %v766 = vpack.c.b16 %v514, %v512
      %v767 = vpack.c.b16 %v515, %v513
      %v768 = vpack.c.b16 %v518, %v516
      %v769 = vpack.c.b16 %v519, %v517
      %v770 = vpack.c.b16 %v522, %v520
      %v771 = vpack.c.b16 %v523, %v521
      %v772 = vpack.c.b16 %v526, %v524
      %v773 = vpack.c.b16 %v527, %v525
      %v774 = vpack.c.b16 %v530, %v528
      %v775 = vpack.c.b16 %v531, %v529
      %v776 = vpack.c.b16 %v534, %v532
      %v777 = vpack.c.b16 %v535, %v533
      %v778 = vpack.c.b16 %v538, %v536
      %v779 = vpack.c.b16 %v539, %v537
      %v780 = vpack.c.b16 %v542, %v540
      %v781 = vpack.c.b16 %v543, %v541
      %v782 = vpack.c.b16 %v546, %v544
      %v783 = vpack.c.b16 %v547, %v545
      %v784 = vpack.c.b16 %v550, %v548
      %v785 = vpack.c.b16 %v551, %v549
      %v786 = vpack.c.b16 %v554, %v552
      %v787 = vpack.c.b16 %v555, %v553
      %v788 = vpack.c.b16 %v558, %v556
      %v789 = vpack.c.b16 %v559, %v557
      %v790 = vpack.c.b16 %v562, %v560
      %v791 = vpack.c.b16 %v563, %v561
      %v792 = vpack.c.b16 %v566, %v564
      %v793 = vpack.c.b16 %v567, %v565
      %v794 = vpack.c.b16 %v570, %v568
      %v795 = vpack.c.b16 %v571, %v569
      %v796 = vpack.c.b16 %v574, %v572
      %v797 = vpack.c.b16 %v575, %v573
      %v798 = vpack.c.b16 %v578, %v576
      %v799 = vpack.c.b16 %v579, %v577
      %v800 = vpack.c.b16 %v582, %v580
      %v801 = vpack.c.b16 %v583, %v581
      %v802 = vpack.c.b16 %v586, %v584
      %v803 = vpack.c.b16 %v587, %v585
      %v804 = vpack.c.b16 %v590, %v588
      %v805 = vpack.c.b16 %v591, %v589
      %v806 = vpack.c.b16 %v594, %v592
      %v807 = vpack.c.b16 %v595, %v593
      %v808 = vpack.c.b16 %v598, %v596
      %v809 = vpack.c.b16 %v599, %v597
      %v810 = vpack.c.b16 %v602, %v600
      %v811 = vpack.c.b16 %v603, %v601
      %v812 = vpack.c.b16 %v606, %v604
      %v813 = vpack.c.b16 %v607, %v605
      %v814 = vpack.c.b16 %v610, %v608
      %v815 = vpack.c.b16 %v611, %v609
      %v816 = vpack.c.b16 %v614, %v612
      %v817 = vpack.c.b16 %v615, %v613
      %v818 = vpack.c.b16 %v618, %v616
      %v819 = vpack.c.b16 %v619, %v617
      %v820 = vpack.c.b16 %v622, %v620
      %v821 = vpack.c.b16 %v623, %v621
      %v822 = vpack.c.b16 %v626, %v624
      %v823 = vpack.c.b16 %v627, %v625
      %v824 = vpack.c.b16 %v630, %v628
      %v825 = vpack.c.b16 %v631, %v629
      %v826 = vpack.c.b16 %v634, %v632
      %v827 = vpack.c.b16 %v635, %v633
      %v828 = vpack.c.b16 %v638, %v636
      %v829 = vpack.c.b16 %v639, %v637
      %v830 = vpack.c.b16 %v642, %v640
      %v831 = vpack.c.b16 %v643, %v641
      %v832 = vpack.c.b16 %v646, %v644
      %v833 = vpack.c.b16 %v647, %v645
      %v834 = vpack.c.b16 %v650, %v648
      %v835 = vpack.c.b16 %v651, %v649
      %v836 = vpack.c.b16 %v654, %v652
      %v837 = vpack.c.b16 %v655, %v653
      %v838 = vpack.c.b16 %v658, %v656
      %v839 = vpack.c.b16 %v659, %v657
      %v840 = vpack.c.b16 %v662, %v660
      %v841 = vpack.c.b16 %v663, %v661
      %v842 = vpack.c.b16 %v666, %v664
      %v843 = vpack.c.b16 %v667, %v665
      %v844 = vpack.c.b16 %v670, %v668
      %v845 = vpack.c.b16 %v671, %v669
      %v846 = vpack.c.b16 %v674, %v672
      %v847 = vpack.c.b16 %v675, %v673
      %v848 = vpack.c.b16 %v678, %v676
      %v849 = vpack.c.b16 %v679, %v677
      %v850 = vpack.c.b16 %v682, %v680
      %v851 = vpack.c.b16 %v683, %v681
      %v852 = vpack.c.b16 %v686, %v684
      %v853 = vpack.c.b16 %v687, %v685
      %v854 = vpack.c.b16 %v690, %v688
      %v855 = vpack.c.b16 %v691, %v689
      %v856 = vpack.c.b16 %v694, %v692
      %v857 = vpack.c.b16 %v695, %v693
      %v858 = vpack.c.b16 %v698, %v696
      %v859 = vpack.c.b16 %v699, %v697
      %v860 = vpack.c.b16 %v702, %v700
      %v861 = vpack.c.b16 %v703, %v701
      %v862 = vpack.c.b16 %v706, %v704
      %v863 = vpack.c.b16 %v707, %v705
      %v864 = vpack.c.b16 %v710, %v708
      %v865 = vpack.c.b16 %v711, %v709
      %v866 = vpack.c.b16 %v714, %v712
      %v867 = vpack.c.b16 %v715, %v713
      %v868 = vpack.c.b16 %v718, %v716
      %v869 = vpack.c.b16 %v719, %v717
      %v870 = vpack.c.b16 %v722, %v720
      %v871 = vpack.c.b16 %v723, %v721
      %v872 = vpack.c.b16 %v726, %v724
      %v873 = vpack.c.b16 %v727, %v725
      %v874 = vpack.c.b16 %v730, %v728
      %v875 = vpack.c.b16 %v731, %v729
      %v876 = vpack.c.b16 %v734, %v732
      %v877 = vpack.c.b16 %v735, %v733
      %v878 = vpack.c.b16 %v738, %v736
      %v879 = vpack.c.b16 %v739, %v737
      %v880 = vpack.c.b16 %v742, %v740
      %v881 = vpack.c.b16 %v743, %v741
      %v882 = vpack.c.b16 %v746, %v744
      %v883 = vpack.c.b16 %v747, %v745
      %v884 = vpack.c.b16 %v750, %v748
      %v885 = vpack.c.b16 %v751, %v749
      %v886 = vpack.c.b16 %v754, %v752
      %v887 = vpack.c.b16 %v755, %v753
      %v888 = vpack.c.b16 %v758, %v756
      %v889 = vpack.c.b16 %v759, %v757
      %v890 = vpack.c.b16 %v762, %v760
      %v891 = vpack.c.b16 %v763, %v761
      %1020 = vmatprep.subr.bf16.mxu0 %v765
      %1021 = vmatpush1.bf16.msra.mxu0 %v764
      %1022 = vmatprep.subr.bf16.mxu0 %v767
      %1023 = vmatpush1.bf16.msra.mxu0 %v766
      %1024 = vmatprep.subr.bf16.mxu0 %v769
      %1025 = vmatpush1.bf16.msra.mxu0 %v768
      %1026 = vmatprep.subr.bf16.mxu0 %v771
      %1027 = vmatpush1.bf16.msra.mxu0 %v770
      %1028 = vmatprep.subr.bf16.mxu0 %v773
      %1029 = vmatpush1.bf16.msra.mxu0 %v772
      %1030 = vmatprep.subr.bf16.mxu0 %v775
      %1031 = vmatpush1.bf16.msra.mxu0 %v774
      %1032 = vmatprep.subr.bf16.mxu0 %v777
      %1033 = vmatpush1.bf16.msra.mxu0 %v776
      %1034 = vmatprep.subr.bf16.mxu0 %v779
      %1035 = vmatpush1.bf16.msra.mxu0 %v778
      %1036 = vmatprep.subr.bf16.mxu0 %v781
      %1037 = vmatpush1.bf16.msra.mxu0 %v780
      %1038 = vmatprep.subr.bf16.mxu0 %v783
      %1039 = vmatpush1.bf16.msra.mxu0 %v782
      %1040 = vmatprep.subr.bf16.mxu0 %v785
      %1041 = vmatpush1.bf16.msra.mxu0 %v784
      %1042 = vmatprep.subr.bf16.mxu0 %v787
      %1043 = vmatpush1.bf16.msra.mxu0 %v786
      %1044 = vmatprep.subr.bf16.mxu0 %v789
      %1045 = vmatpush1.bf16.msra.mxu0 %v788
      %1046 = vmatprep.subr.bf16.mxu0 %v791
      %1047 = vmatpush1.bf16.msra.mxu0 %v790
      %1048 = vmatprep.subr.bf16.mxu0 %v793
      %1049 = vmatpush1.bf16.msra.mxu0 %v792
      %1050 = vmatprep.subr.bf16.mxu0 %v795
      %1051 = vmatpush1.bf16.msra.mxu0 %v794
      %1052 = vmatprep.mubr.bf16.mxu0 %v233
      %1053 = vmatmul.mubr.bf16.gmra.mrb[0].mxu0 %v232
      %v1054 = vpop.f32.mrb[0].mxu0
      %v1055 = vadd.f32 %v373, %v1054
      %v1056 = vpop.f32.mrb[0].mxu0
      %v1057 = vadd.f32 %v377, %v1056
      %v1058 = vpop.f32.mrb[0].mxu0
      %v1059 = vpop.f32.mrb[0].mxu0
      %1060 = vdwg.mxu0
      %1061 = vmatprep.subr.bf16.mxu0 %v797
      %1062 = vmatpush1.bf16.msra.mxu0 %v796
      %1063 = vmatprep.subr.bf16.mxu0 %v799
      %1064 = vmatpush1.bf16.msra.mxu0 %v798
      %1065 = vmatprep.subr.bf16.mxu0 %v801
      %1066 = vmatpush1.bf16.msra.mxu0 %v800
      %1067 = vmatprep.subr.bf16.mxu0 %v803
      %1068 = vmatpush1.bf16.msra.mxu0 %v802
      %1069 = vmatprep.subr.bf16.mxu0 %v805
      %1070 = vmatpush1.bf16.msra.mxu0 %v804
      %1071 = vmatprep.subr.bf16.mxu0 %v807
      %1072 = vmatpush1.bf16.msra.mxu0 %v806
      %1073 = vmatprep.subr.bf16.mxu0 %v809
      %1074 = vmatpush1.bf16.msra.mxu0 %v808
      %1075 = vmatprep.subr.bf16.mxu0 %v811
      %1076 = vmatpush1.bf16.msra.mxu0 %v810
      %1077 = vmatprep.subr.bf16.mxu0 %v813
      %1078 = vmatpush1.bf16.msra.mxu0 %v812
      %1079 = vmatprep.subr.bf16.mxu0 %v815
      %1080 = vmatpush1.bf16.msra.mxu0 %v814
      %1081 = vmatprep.subr.bf16.mxu0 %v817
      %1082 = vmatpush1.bf16.msra.mxu0 %v816
      %1083 = vmatprep.subr.bf16.mxu0 %v819
      %1084 = vmatpush1.bf16.msra.mxu0 %v818
      %1085 = vmatprep.subr.bf16.mxu0 %v821
      %1086 = vmatpush1.bf16.msra.mxu0 %v820
      %1087 = vmatprep.subr.bf16.mxu0 %v823
      %1088 = vmatpush1.bf16.msra.mxu0 %v822
      %1089 = vmatprep.subr.bf16.mxu0 %v825
      %1090 = vmatpush1.bf16.msra.mxu0 %v824
      %1091 = vmatprep.subr.bf16.mxu0 %v827
      %1092 = vmatpush1.bf16.msra.mxu0 %v826
      %1093 = vmatprep.mubr.bf16.mxu0 %v235
      %1094 = vmatmul.mubr.bf16.gmra.mrb[0].mxu0 %v234
      %v1095 = vpop.f32.mrb[0].mxu0
      %v1096 = vadd.f32 %v1055, %v1095
      %v1097 = vpop.f32.mrb[0].mxu0
      %v1098 = vadd.f32 %v1057, %v1097
      %v1099 = vpop.f32.mrb[0].mxu0
      %v1100 = vpop.f32.mrb[0].mxu0
      %1101 = vdwg.mxu0
      %1102 = vmatprep.subr.bf16.mxu0 %v829
      %1103 = vmatpush1.bf16.msra.mxu0 %v828
      %1104 = vmatprep.subr.bf16.mxu0 %v831
      %1105 = vmatpush1.bf16.msra.mxu0 %v830
      %1106 = vmatprep.subr.bf16.mxu0 %v833
      %1107 = vmatpush1.bf16.msra.mxu0 %v832
      %1108 = vmatprep.subr.bf16.mxu0 %v835
      %1109 = vmatpush1.bf16.msra.mxu0 %v834
      %1110 = vmatprep.subr.bf16.mxu0 %v837
      %1111 = vmatpush1.bf16.msra.mxu0 %v836
      %1112 = vmatprep.subr.bf16.mxu0 %v839
      %1113 = vmatpush1.bf16.msra.mxu0 %v838
      %1114 = vmatprep.subr.bf16.mxu0 %v841
      %1115 = vmatpush1.bf16.msra.mxu0 %v840
      %1116 = vmatprep.subr.bf16.mxu0 %v843
      %1117 = vmatpush1.bf16.msra.mxu0 %v842
      %1118 = vmatprep.subr.bf16.mxu0 %v845
      %1119 = vmatpush1.bf16.msra.mxu0 %v844
      %1120 = vmatprep.subr.bf16.mxu0 %v847
      %1121 = vmatpush1.bf16.msra.mxu0 %v846
      %1122 = vmatprep.subr.bf16.mxu0 %v849
      %1123 = vmatpush1.bf16.msra.mxu0 %v848
      %1124 = vmatprep.subr.bf16.mxu0 %v851
      %1125 = vmatpush1.bf16.msra.mxu0 %v850
      %1126 = vmatprep.subr.bf16.mxu0 %v853
      %1127 = vmatpush1.bf16.msra.mxu0 %v852
      %1128 = vmatprep.subr.bf16.mxu0 %v855
      %1129 = vmatpush1.bf16.msra.mxu0 %v854
      %1130 = vmatprep.subr.bf16.mxu0 %v857
      %1131 = vmatpush1.bf16.msra.mxu0 %v856
      %1132 = vmatprep.subr.bf16.mxu0 %v859
      %1133 = vmatpush1.bf16.msra.mxu0 %v858
      %1134 = vmatprep.mubr.bf16.mxu0 %v237
      %1135 = vmatmul.mubr.bf16.gmra.mrb[0].mxu0 %v236
      %v1136 = vpop.f32.mrb[0].mxu0
      %v1137 = vadd.f32 %v1096, %v1136
      %v1138 = vpop.f32.mrb[0].mxu0
      %v1139 = vadd.f32 %v1098, %v1138
      %v1140 = vpop.f32.mrb[0].mxu0
      %v1141 = vpop.f32.mrb[0].mxu0
      %1142 = vdwg.mxu0
      %1143 = vmatprep.subr.bf16.mxu0 %v861
      %1144 = vmatpush1.bf16.msra.mxu0 %v860
      %1145 = vmatprep.subr.bf16.mxu0 %v863
      %1146 = vmatpush1.bf16.msra.mxu0 %v862
      %1147 = vmatprep.subr.bf16.mxu0 %v865
      %1148 = vmatpush1.bf16.msra.mxu0 %v864
      %1149 = vmatprep.subr.bf16.mxu0 %v867
      %1150 = vmatpush1.bf16.msra.mxu0 %v866
      %1151 = vmatprep.subr.bf16.mxu0 %v869
      %1152 = vmatpush1.bf16.msra.mxu0 %v868
      %1153 = vmatprep.subr.bf16.mxu0 %v871
      %1154 = vmatpush1.bf16.msra.mxu0 %v870
      %1155 = vmatprep.subr.bf16.mxu0 %v873
      %1156 = vmatpush1.bf16.msra.mxu0 %v872
      %1157 = vmatprep.subr.bf16.mxu0 %v875
      %1158 = vmatpush1.bf16.msra.mxu0 %v874
      %1159 = vmatprep.subr.bf16.mxu0 %v877
      %1160 = vmatpush1.bf16.msra.mxu0 %v876
      %1161 = vmatprep.subr.bf16.mxu0 %v879
      %1162 = vmatpush1.bf16.msra.mxu0 %v878
      %1163 = vmatprep.subr.bf16.mxu0 %v881
      %1164 = vmatpush1.bf16.msra.mxu0 %v880
      %1165 = vmatprep.subr.bf16.mxu0 %v883
      %1166 = vmatpush1.bf16.msra.mxu0 %v882
      %1167 = vmatprep.subr.bf16.mxu0 %v885
      %1168 = vmatpush1.bf16.msra.mxu0 %v884
      %1169 = vmatprep.subr.bf16.mxu0 %v887
      %1170 = vmatpush1.bf16.msra.mxu0 %v886
      %1171 = vmatprep.subr.bf16.mxu0 %v889
      %1172 = vmatpush1.bf16.msra.mxu0 %v888
      %1173 = vmatprep.subr.bf16.mxu0 %v891
      %1174 = vmatpush1.bf16.msra.mxu0 %v890
      %1175 = vmatprep.mubr.bf16.mxu0 %v239
      %1176 = vmatmul.mubr.bf16.gmra.mrb[0].mxu0 %v238
      %v1177 = vpop.f32.mrb[0].mxu0
      %v1178 = vadd.f32 %v1137, %v1177
      %v1179 = vpop.f32.mrb[0].mxu0
      %v1180 = vadd.f32 %v1139, %v1179
      %v1181 = vpop.f32.mrb[0].mxu0
      %v1182 = vpop.f32.mrb[0].mxu0
      %1183 = vdwg.mxu0
      %v1184 = vmax.f32 %v1178, 0.0
      %v1185 = vmax.f32 %v1180, 0.0
      %v1186 = vld [vmem:[%s3] sm:$0x3]
      %v1188 = vlaneseq
      %v1189 = vshrl.u32 %v1188, 7
      %v1190 = vsub.s32 0, %v1189
      %v1191 = vrot.slane %v1186, %v1190
      %v1192 = vlaneseq
      %v1193 = vshrl.u32 %v1192, 7
      %v1194 = vsub.s32 1, %v1193
      %v1195 = vrot.slane %v1186, %v1194
      %v1198 = vmul.f32 %v1184, %v1191
      %v1199 = vmul.f32 %v1185, %v1195
      %v1200 = vadd.f32 %v1198, %v1199
      %1201 = vadd.xlane.f32.xlu0 %v1200
      %v1202 = vpop.xlane.xlu0 %1201
      %s1203 = sld [smem:[#allocation2]]
      %v1204 = vstv %s1203
      %v1205 = vadd.f32 %v1202, %v1204
      %vm1206 = vcmask 7168
      %1207 = vst.msk [vmem:[%s223] sm:$0xff] %vm1206, %v1205
      %p1208 = scmp.lt.s32.totalorder %s17, 1
      %s1209 = scalar_select %p1208, %s17, 1
      %s1210 = smul.addr %s1209, 8
      %s1211 = scalar_lea.vmem %s5, %s1210
      // Predicated region
      $region41: #{simple_binary_classifier.1} parent=39 // pred_check
        %p1212 = pneg %p145
      $region42: #{simple_binary_classifier.1} parent=39 // pred_check_branch
        %1214 = sbr.rel (%p1212) target = $region44
      $region43: #{simple_binary_classifier.1} parent=39 // pred_region
        _
      $region44: #{simple_binary_classifier.1} parent=39 // pred_fallthru
        _
    $region40: #{simple_binary_classifier.1} parent=5 // pred_fallthru
      _
    %p1215 = scmp.le.s32.totalorder 2, %s12
    // Predicated region
    $region45: #{simple_binary_classifier.1} parent=5 // pred_check
      %p1216 = pneg %p1215
    $region46: #{simple_binary_classifier.1} parent=5 // pred_check_branch
      %1218 = sbr.rel (%p1216) target = $region48
    $region47: #{simple_binary_classifier.1} parent=5 // pred_region
      %s1219 = ssub.s32 %s12, 2
      // Predicated region
      $region49: #{simple_binary_classifier.1} parent=47 // pred_check
        %p1220 = pneg %p151
      $region50: #{simple_binary_classifier.1} parent=47 // pred_check_branch
        %1222 = sbr.rel (%p1220) target = $region52
      $region51: #{simple_binary_classifier.1} parent=47 // pred_region
        %p1223 = scmp.lt.s32.totalorder %s18, 1
        %s1224 = scalar_select %p1223, %s18, 1
        %s1225 = smul.addr %s1224, 8
        %s1226 = scalar_lea.vmem %s5, %s1225
      $region52: #{simple_binary_classifier.1} parent=47 // pred_fallthru
        _
    $region48: #{simple_binary_classifier.1} parent=5 // pred_fallthru
      _
  $region6: #{simple_binary_classifier.1} parent=0 // loop_footer
    %s16 = sadd.s32 1, %s12
  $region7: #{simple_binary_classifier.1} parent=0 // loop_footer_branch
    %11 = sbr.rel target = $region3
  $region8: #{simple_binary_classifier.1} parent=0 // loop_exit
    _

</llo_original>
